<compile_context>
chip_gen: v7x
topology: tpu7x:2x2x1
jax: 0.10.0
libtpu: 0.0.40
codegen_flags: <defaults>
</compile_context>

<pallas_src>
import math

import jax
import jax.numpy as jnp
from jax.experimental import pallas as pl
from jax.experimental.pallas import tpu as pltpu


def _spatial_dropout_kernel(mask_ref, x_ref, o_ref):
    """mask_ref: (B, C_f) fully VMEM-resident; x_ref / o_ref: (1, TS, C_f) tiles.

    Pure load -> broadcast-multiply -> store in the input dtype.
    """
    b = pl.program_id(0)
    m = mask_ref[pl.ds(b, 1), :]               # (1, C_f) channel mask for this batch row
    o_ref[0] = x_ref[0] * m                    # (TS, C_f) * (1, C_f) broadcast


def _make_channel_mask(seed, batch, channels, keep_prob, dtype):
    """(B, C) dropout mask: 0 with prob drop, 1/keep_prob with prob keep."""
    key = jax.random.PRNGKey(seed)
    keep = jax.random.bernoulli(key, p=keep_prob, shape=(batch, channels))
    mask = jnp.where(keep, jnp.float32(1.0 / keep_prob), jnp.float32(0.0))
    return mask.astype(dtype)


def spatial_dropout(x, seed, *, drop=0.5, training=True):
    """Pallas SpatialDropout forward. x: [B, ..., C] (channels-last)."""
    if (not training) or drop == 0.0:
        return x
    if drop >= 1.0:
        return jnp.zeros_like(x)

    orig_shape = x.shape
    B = orig_shape[0]
    C = orig_shape[-1]
    S = int(math.prod(orig_shape[1:-1])) if x.ndim > 2 else 1

    keep_prob = 1.0 - drop
    mask = _make_channel_mask(seed, B, C, keep_prob, x.dtype)      # (B, C)

    x3 = x.reshape(B, S, C)

    # ---- lane-dense folding: kernel last dim is always a multiple of 128 ----
    g = 128 // math.gcd(C, 128)                 # rows folded into the channel axis
    if g > 1:
        S_pad = pl.cdiv(S, g) * g
        if S_pad != S:                          # cheap O(B*pad*C) pad; sliced off after
            x3 = jnp.pad(x3, ((0, 0), (0, S_pad - S), (0, 0)))
        S_f, C_f = S_pad // g, C * g
        mask_f = jnp.tile(mask, (1, g))         # (B, g*C), matches folded layout
    else:
        S_pad, S_f, C_f = S, S, C
        mask_f = mask
    x3 = x3.reshape(B, S_f, C_f)

    # ---- S-tile size: ~4 MiB per block, rounded to the dtype sublane quantum ----
    itemsize = jnp.dtype(x.dtype).itemsize
    sub = max(8, 32 // itemsize)                # 8 for f32, 16 for bf16, 32 for int8
    target_rows = max(1, (4 << 20) // (C_f * itemsize))
    if target_rows >= S_f:
        ts = S_f                                # full extent: always legal
    else:
        ts = max(sub, (target_rows // sub) * sub)
    # Make sure both v7x TensorCores get work: keep >= 2 total grid tiles when cheap.
    if B * pl.cdiv(S_f, ts) < 2 and S_f >= 2 * sub:
        ts = pl.cdiv(pl.cdiv(S_f, 2), sub) * sub
    n_s = pl.cdiv(S_f, ts)

    # ---- VMEM budget from actual block sizes (double-buffered in + out + mask) ----
    block_bytes = ts * C_f * itemsize
    mask_bytes = B * C_f * itemsize
    vmem_need = 2 * 2 * block_bytes + mask_bytes
    vmem_limit = int(min(max(vmem_need * 5 // 4 + (1 << 20), 4 << 20), 32 << 20))

    out = pl.pallas_call(
        _spatial_dropout_kernel,
        out_shape=jax.ShapeDtypeStruct((B, S_f, C_f), x.dtype),
        grid=(B, n_s),
        in_specs=[
            # Tiny (B, C_f) mask stays fully resident in VMEM (no pipeline buffer).
            pl.BlockSpec(memory_space=pltpu.MemorySpace.VMEM),
            pl.BlockSpec((1, ts, C_f), lambda b, s: (b, s, 0)),    # activation tile
        ],
        out_specs=pl.BlockSpec((1, ts, C_f), lambda b, s: (b, s, 0)),
        input_output_aliases={1: 0},           # write result back into x's HBM buffer
        compiler_params=pltpu.CompilerParams(
            dimension_semantics=("parallel", "parallel"),  # all tiles independent
            vmem_limit_bytes=vmem_limit,
        ),
    )(mask_f, x3)

    out = out.reshape(B, S_pad, C)
    if S_pad != S:
        out = out[:, :S, :]
    return out.reshape(orig_shape)


if __name__ == "__main__":
    key = jax.random.PRNGKey(0)
    B, S, E = 2, 8, 32                          # (batch, seq, hidden) — channels-last
    x = jax.random.normal(key, (B, S, E), dtype=jnp.float32)

    drop, seed = 0.5, 42
    keep_prob = 1.0 - drop
    y = jax.block_until_ready(spatial_dropout(x, seed, drop=drop, training=True))

    # Exact reference: same mask construction, broadcast over the middle dims.
    mask = _make_channel_mask(seed, B, E, keep_prob, x.dtype)       # (B, E)
    expected = x * mask[:, None, :]
    assert y.shape == x.shape and y.dtype == x.dtype
    assert bool(jnp.allclose(y, expected, atol=1e-6, rtol=1e-6))

    # Structural checks: each output is 0 or x/keep_prob; pattern shared over S.
    zero_or_scaled = jnp.isclose(y, 0.0) | jnp.isclose(y, x / keep_prob, rtol=1e-5, atol=1e-6)
    assert bool(jnp.all(zero_or_scaled))

    # Eval mode / drop==0 are identity; drop==1 is all zeros.
    assert bool(jnp.all(spatial_dropout(x, seed, drop=drop, training=False) == x))
    assert bool(jnp.all(spatial_dropout(x, seed, drop=1.0, training=True) == 0))

    # 4-D case (CNN feature map, channels-last): middle-dim flattening + folding (C=32 -> 128).
    x4 = jax.random.normal(jax.random.PRNGKey(1), (2, 4, 16, 32), dtype=jnp.float32)
    y4 = jax.block_until_ready(spatial_dropout(x4, seed=7, drop=0.3, training=True))
    mask4 = _make_channel_mask(7, 2, 32, 0.7, x4.dtype)
    assert bool(jnp.allclose(y4, x4 * mask4[:, None, None, :], atol=1e-6, rtol=1e-6))

    # Non-divisible S exercises the pad-to-fold path (C=24 -> g=16, S=10 -> padded to 16).
    x5 = jax.random.normal(jax.random.PRNGKey(2), (2, 10, 24), dtype=jnp.float32)
    y5 = jax.block_until_ready(spatial_dropout(x5, seed=3, drop=0.25, training=True))
    mask5 = _make_channel_mask(3, 2, 24, 0.75, x5.dtype)
    assert bool(jnp.allclose(y5, x5 * mask5[:, None, :], atol=1e-6, rtol=1e-6))

    # bf16 case: dtype-native compute, sublane quantum 16, pad path (C=48 -> g=8, S=33 -> 40).
    x6 = jax.random.normal(jax.random.PRNGKey(3), (2, 33, 48), dtype=jnp.bfloat16)
    y6 = jax.block_until_ready(spatial_dropout(x6, seed=11, drop=0.4, training=True))
    mask6 = _make_channel_mask(11, 2, 48, 0.6, x6.dtype)
    ref6 = x6 * mask6[:, None, :]
    assert y6.dtype == x6.dtype
    assert bool(jnp.allclose(y6.astype(jnp.float32), ref6.astype(jnp.float32), atol=0, rtol=0))

    print("KERNEL_OK")
</pallas_src>

<mosaic_0001>
module attributes {stable_mosaic.version = 11 : i64} {
  func.func @_spatial_dropout_kernel(%arg0: i32, %arg1: i32, %arg2: memref<2x128xf32, #tpu.memory_space<vmem>>, %arg3: memref<1x2x128xf32, #tpu.memory_space<vmem>>, %arg4: memref<1x2x128xf32, #tpu.memory_space<vmem>>) attributes {dimension_semantics = [#tpu.dimension_semantics<parallel>, #tpu.dimension_semantics<parallel>], iteration_bounds = array<i64: 2, 1>, scalar_prefetch = 0 : i64, scratch_operands = 0 : i64, tpu.core_type = #tpu.core_type<tc>, window_params = [{pipeline_mode = #tpu.pipeline_mode<synchronous>, transform_indices = @transform_0, window_bounds = array<i64: 2, 128>}, {transform_indices = @transform_1, window_bounds = array<i64: 1, 2, 128>}, {transform_indices = @transform_2, window_bounds = array<i64: 1, 2, 128>}]} {
    %0 = arith.index_cast %arg0 : i32 to index
    %c0 = arith.constant 0 : index
    %1 = vector.load %arg2[%0, %c0] : memref<2x128xf32, #tpu.memory_space<vmem>>, vector<1x128xf32>
    %c0_0 = arith.constant 0 : index
    %c0_1 = arith.constant 0 : index
    %c0_2 = arith.constant 0 : index
    %2 = vector.load %arg3[%c0_0, %c0_1, %c0_2] : memref<1x2x128xf32, #tpu.memory_space<vmem>>, vector<1x2x128xf32>
    %3 = vector.shape_cast %2 : vector<1x2x128xf32> to vector<2x128xf32>
    %4 = vector.broadcast %1 : vector<1x128xf32> to vector<2x128xf32>
    %5 = arith.mulf %3, %4 : vector<2x128xf32>
    %c0_3 = arith.constant 0 : index
    %c0_4 = arith.constant 0 : index
    %c0_5 = arith.constant 0 : index
    %6 = vector.load %arg4[%c0_3, %c0_4, %c0_5] : memref<1x2x128xf32, #tpu.memory_space<vmem>>, vector<1x2x128xf32>
    %7 = vector.shape_cast %6 : vector<1x2x128xf32> to vector<2x128xf32>
    %8 = vector.shape_cast %5 : vector<2x128xf32> to vector<1x2x128xf32>
    tpu.vector_store %arg4[%c0_3, %c0_4, %c0_5], %8 {strides = array<i32>} : memref<1x2x128xf32, #tpu.memory_space<vmem>>, vector<1x2x128xf32>,
    return
  }
  func.func @transform_0(%arg0: i32, %arg1: i32) -> (i32, i32) {
    %c0_i32 = arith.constant 0 : i32
    %c0_i32_0 = arith.constant 0 : i32
    %c0_i32_1 = arith.constant 0 : i32
    return %c0_i32, %c0_i32_0 : i32, i32
  }
  func.func @transform_1(%arg0: i32, %arg1: i32) -> (i32, i32, i32) {
    %c0_i32 = arith.constant 0 : i32
    %c0_i32_0 = arith.constant 0 : i32
    return %arg0, %arg1, %c0_i32 : i32, i32, i32
  }
  func.func @transform_2(%arg0: i32, %arg1: i32) -> (i32, i32, i32) {
    %c0_i32 = arith.constant 0 : i32
    %c0_i32_0 = arith.constant 0 : i32
    return %arg0, %arg1, %c0_i32 : i32, i32, i32
  }
}

</mosaic_0001>

<llo_original>
// kernel: tpu_custom_call.1
$region0: #{tpu_custom_call.1}
  #allocation0 [shape = 'u32[]', space=smem, size = 0x4, offset = 0x4, fixed_abs, tag = 'smem constant byte address 0x4 - core index']
  #allocation1 [shape = 'u32[144,128]{1,0:T(1,128)}', space=vmem, size = 0x12000, scoped, tag = 'internal scratch']
  %s0 = inlined_call_operand.vmem [shape: f32[2,128], index: 0, kind: input, shape index: {}]
  %s1 = inlined_call_operand.hbm [shape: f32[2,2,128], index: 1, kind: input, shape index: {}, may-alias: {1,2}]
  %s2 = inlined_call_operand.hbm [shape: f32[2,2,128], index: 2, kind: output, shape index: {}, may-alias: {1,2}]
  %s3 = sld [smem:[#allocation0]]
  $region45: #{tpu_custom_call.1} parent=0
    _
  %s5 = ssub.s32 1, %s3
  %s6 = scalar_select 0, %s5, %s3
  $region1: #{tpu_custom_call.1} parent=0
    #allocation2 [shape = 'u8[2048]{0}', space=vmem, size = 0x800, scoped, tag = 'input window, operand 1']
    #allocation3 [shape = 's32[2]{0}', space=sflag, size = 0x8, scoped, tag = 'scoped memory for tpu_custom_call.1']
    #allocation4 [shape = 's32[2]{0}', space=sflag, size = 0x8, scoped, tag = 'scoped memory for tpu_custom_call.1']
    #allocation5 [shape = 'u8[2048]{0}', space=vmem, size = 0x800, scoped, tag = 'output window, operand 0']
    %7 = vsyncpa [#allocation3], 0
    %s8 = scalar_lea.sflag [#allocation3], 1
    %9 = vsyncpa %s8, 0
    %10 = vsyncpa [#allocation4], 0
    %s11 = scalar_lea.sflag [#allocation4], 1
    %12 = vsyncpa %s11, 0
    loop: start=0, step=1, limit=4
    $region2: #{tpu_custom_call.1} parent=1 // loop_pre_header
      _
    $region3: #{tpu_custom_call.1} parent=1 // loop_header
      %s14 = sphi 0, %s18
      %p15 = scmp.ge.s32.totalorder %s14, 4
      %s21 = sphi 0, %s33
      %s22 = sphi 0, %s29
      %s23 = sphi 0, %s21
      %s24 = sphi 0, %s22
      %s25 = sphi 0, %s23
      %s26 = sphi 0, %s24
      %s34 = sphi 0, %s34
      %s36 = sphi 0, %s34
      %s37 = sphi 0, %s36
      %s51 = sphi 0, %s37
      %s59 = sphi 0, %s61
      %s62 = sphi 0, %s59
      %s63 = sphi 0, %s62
      %s79 = sphi 0, %s63
      %s87 = sphi 0, %s89
      %s90 = sphi 0, %s87
      %s91 = sphi 0, %s90
      %s107 = sphi 0, %s91
    $region4: #{tpu_custom_call.1} parent=1 // loop_header_branch
      %17 = sbr.rel (%p15) target = $region8
    $region5: #{tpu_custom_call.1} parent=1 // loop_body
      %s19 = ssub.s32 %s14, 1
      %s20 = ssub.s32 %s14, 2
      %s27 = sadd.s32 1, %s22
      %p28 = scmp.ge.s32.totalorder %s27, 1
      %s29 = scalar_select %p28, 0, %s27
      %s30 = sadd.s32 1, %s21
      %s31 = scalar_select %p28, %s30, %s21
      %p32 = scmp.ge.s32.totalorder %s31, 2
      %s33 = scalar_select %p32, 0, %s31
      %s35 = sadd.s32 %s34, 1
      %p38 = scmp.eq.s32.totalorder %s14, 1
      %p39 = scmp.ne.s32.totalorder %s34, %s36
      %p40 = scmp.eq.s32.totalorder %s14, 0
      %p41 = por %p39, %p40
      %p42 = scmp.ne.s32.totalorder %s34, %s36
      %p43 = scmp.eq.s32.totalorder %s19, 1
      %p44 = por %p42, %p43
      %p45 = scmp.ne.s32.totalorder %s36, %s37
      %p46 = scmp.eq.s32.totalorder %s19, 0
      %p47 = por %p45, %p46
      %p48 = scmp.ne.s32.totalorder %s36, %s37
      %p49 = scmp.eq.s32.totalorder %s20, 1
      %p50 = por %p48, %p49
      %p52 = scmp.ne.s32.totalorder %s37, %s51
      %p53 = scmp.eq.s32.totalorder %s20, 0
      %p54 = por %p52, %p53
      %s55 = ssub.s32 %s21, %s33
      %s56 = ssub.s32 %s22, %s29
      %s57 = sor.u32 %s55, %s56
      %p58 = scmp.eq.s32.totalorder %s57, 0
      %s60 = sadd.s32 %s59, 1
      %s61 = scalar_select %p58, %s59, %s60
      %p64 = pneg %p58
      %p65 = scmp.eq.s32.totalorder %s14, 1
      %p66 = por %p64, %p65
      %p67 = scmp.ne.s32.totalorder %s59, %s62
      %p68 = scmp.eq.s32.totalorder %s14, 0
      %p69 = por %p67, %p68
      %p70 = scmp.ne.s32.totalorder %s59, %s62
      %p71 = scmp.eq.s32.totalorder %s19, 1
      %p72 = por %p70, %p71
      %p73 = scmp.ne.s32.totalorder %s62, %s63
      %p74 = scmp.eq.s32.totalorder %s19, 0
      %p75 = por %p73, %p74
      %p76 = scmp.ne.s32.totalorder %s62, %s63
      %p77 = scmp.eq.s32.totalorder %s20, 1
      %p78 = por %p76, %p77
      %p80 = scmp.ne.s32.totalorder %s63, %s79
      %p81 = scmp.eq.s32.totalorder %s20, 0
      %p82 = por %p80, %p81
      %s83 = ssub.s32 %s21, %s33
      %s84 = ssub.s32 %s22, %s29
      %s85 = sor.u32 %s83, %s84
      %p86 = scmp.eq.s32.totalorder %s85, 0
      %s88 = sadd.s32 %s87, 1
      %s89 = scalar_select %p86, %s87, %s88
      %p92 = pneg %p86
      %p93 = scmp.eq.s32.totalorder %s14, 1
      %p94 = por %p92, %p93
      %p95 = scmp.ne.s32.totalorder %s87, %s90
      %p96 = scmp.eq.s32.totalorder %s14, 0
      %p97 = por %p95, %p96
      %p98 = scmp.ne.s32.totalorder %s87, %s90
      %p99 = scmp.eq.s32.totalorder %s19, 1
      %p100 = por %p98, %p99
      %p101 = scmp.ne.s32.totalorder %s90, %s91
      %p102 = scmp.eq.s32.totalorder %s19, 0
      %p103 = por %p101, %p102
      %p104 = scmp.ne.s32.totalorder %s90, %s91
      %p105 = scmp.eq.s32.totalorder %s20, 1
      %p106 = por %p104, %p105
      %p108 = scmp.ne.s32.totalorder %s91, %s107
      %p109 = scmp.eq.s32.totalorder %s20, 0
      %p110 = por %p108, %p109
      %p111 = scmp.le.s32.totalorder 1, %s14
      %p112 = scmp.lt.s32.totalorder %s14, 3
      %p113 = pnand %p111, %p112
      %p114 = pneg %p113
      // Predicated region
      $region9: #{tpu_custom_call.1} parent=5 // pred_check
        _
      $region10: #{tpu_custom_call.1} parent=5 // pred_check_branch
        %116 = sbr.rel (%p113) target = $region12
      $region11: #{tpu_custom_call.1} parent=5 // pred_region
        %s117 = ssub.s32 %s14, 1
        // Predicated region
        $region13: #{tpu_custom_call.1} parent=11 // pred_check
          %p118 = pneg %p47
        $region14: #{tpu_custom_call.1} parent=11 // pred_check_branch
          %120 = sbr.rel (%p118) target = $region16
        $region15: #{tpu_custom_call.1} parent=11 // pred_region
          _
        $region16: #{tpu_custom_call.1} parent=11 // pred_fallthru
          _
      $region12: #{tpu_custom_call.1} parent=5 // pred_fallthru
        _
      %p121 = scmp.lt.s32.totalorder %s14, 2
      // Predicated region
      $region17: #{tpu_custom_call.1} parent=5 // pred_check
        %p122 = pneg %p121
      $region18: #{tpu_custom_call.1} parent=5 // pred_check_branch
        %124 = sbr.rel (%p122) target = $region20
      $region19: #{tpu_custom_call.1} parent=5 // pred_region
        // Predicated region
        $region21: #{tpu_custom_call.1} parent=19 // pred_check
          %p125 = pneg %p69
        $region22: #{tpu_custom_call.1} parent=19 // pred_check_branch
          %127 = sbr.rel (%p125) target = $region24
        $region23: #{tpu_custom_call.1} parent=19 // pred_region
          %s128 = sand.u32 %s59, 1
          %s129 = scalar_lea.sflag [#allocation3], %s128
          %s130 = sand.u32 %s59, 1
          %s131 = smul.addr %s130, 2
          %s132 = scalar_lea.vmem [#allocation2], %s131
          %s134 = ssub.s32 32, 32
          %135 = vsyncadd %s129, %s134
          %s136 = sadd.s32 %s22, %s21
          %s137 = smul.addr %s136, 32
          %s138 = scalar_lea.hbm %s1, %s137
          %s140 = sshll.u32 %s132, 4
          %s141 = int_to_ptr.vmem [resolvable:$true] %s140
          %143 = dma.hbm_to_vmem [thread:$0]  %s138, 32, %s141, %s129
        $region24: #{tpu_custom_call.1} parent=19 // pred_fallthru
          _
      $region20: #{tpu_custom_call.1} parent=5 // pred_fallthru
        _
      %p144 = scmp.le.s32.totalorder 1, %s14
      %p145 = scmp.lt.s32.totalorder %s14, 3
      %p146 = pnand %p144, %p145
      %p147 = pneg %p146
      // Predicated region
      $region25: #{tpu_custom_call.1} parent=5 // pred_check
        _
      $region26: #{tpu_custom_call.1} parent=5 // pred_check_branch
        %149 = sbr.rel (%p146) target = $region28
      $region27: #{tpu_custom_call.1} parent=5 // pred_region
        %s150 = ssub.s32 %s14, 1
        %s151 = sand.u32 %s62, 1
        %s152 = scalar_lea.sflag [#allocation3], %s151
        %s153 = sand.u32 %s62, 1
        %s154 = smul.addr %s153, 2
        %s155 = scalar_lea.vmem [#allocation2], %s154
        // Predicated region
        $region29: #{tpu_custom_call.1} parent=27 // pred_check
          %p156 = pneg %p75
        $region30: #{tpu_custom_call.1} parent=27 // pred_check_branch
          %158 = sbr.rel (%p156) target = $region32
        $region31: #{tpu_custom_call.1} parent=27 // pred_region
          %159 = dma.done %s152, 32
        $region32: #{tpu_custom_call.1} parent=27 // pred_fallthru
          _
        %p160 = pneg %p47
        %p161 = pneg %p44
        %s162 = sand.u32 %s62, 1
        %s163 = scalar_lea.sflag [#allocation3], %s162
        %s164 = sand.u32 %s62, 1
        %s165 = smul.addr %s164, 2
        %s166 = scalar_lea.vmem [#allocation2], %s165
        %p167 = pneg %p75
        %p168 = pneg %p72
        %p169 = pneg %p103
        %p170 = pneg %p100
        %s171 = sand.u32 %s90, 1
        %s172 = scalar_lea.sflag [#allocation4], %s171
        %s173 = sand.u32 %s90, 1
        %s174 = smul.addr %s173, 2
        %s175 = scalar_lea.vmem [#allocation5], %s174
        %s176 = scalar_lea.vmem %s0, %s23
        %v177 = vld [vmem:[%s176] sm:$0x1]
        %v178 = vld [vmem:[%s155] sm:$0x3]
        %v179 = vlaneseq
        %v180 = vshrl.u32 %v179, 7
        %v181 = vsub.s32 0, %v180
        %v182 = vrot.slane %v177, %v181
        %v183 = vmul.f32 %v178, %v182
        %184 = vst [vmem:[%s175] sm:$0x3] %v183
        %s185 = sand.u32 %s90, 1
        %s186 = scalar_lea.sflag [#allocation4], %s185
        %s187 = sand.u32 %s90, 1
        %s188 = smul.addr %s187, 2
        %s189 = scalar_lea.vmem [#allocation5], %s188
        // Predicated region
        $region33: #{tpu_custom_call.1} parent=27 // pred_check
          %p190 = pneg %p100
        $region34: #{tpu_custom_call.1} parent=27 // pred_check_branch
          %192 = sbr.rel (%p190) target = $region36
        $region35: #{tpu_custom_call.1} parent=27 // pred_region
          %s194 = ssub.s32 32, 32
          %195 = vsyncadd %s186, %s194
          %s196 = sadd.s32 %s24, %s23
          %s197 = smul.addr %s196, 32
          %s198 = scalar_lea.hbm %s2, %s197
          %s200 = sshll.u32 %s189, 4
          %s201 = int_to_ptr.vmem [resolvable:$true] %s200
          %203 = dma.vmem_to_hbm [thread:$0]  %s201, 32, %s198, %s186
        $region36: #{tpu_custom_call.1} parent=27 // pred_fallthru
          _
      $region28: #{tpu_custom_call.1} parent=5 // pred_fallthru
        _
      %p204 = scmp.le.s32.totalorder 2, %s14
      // Predicated region
      $region37: #{tpu_custom_call.1} parent=5 // pred_check
        %p205 = pneg %p204
      $region38: #{tpu_custom_call.1} parent=5 // pred_check_branch
        %207 = sbr.rel (%p205) target = $region40
      $region39: #{tpu_custom_call.1} parent=5 // pred_region
        %s208 = ssub.s32 %s14, 2
        // Predicated region
        $region41: #{tpu_custom_call.1} parent=39 // pred_check
          %p209 = pneg %p106
        $region42: #{tpu_custom_call.1} parent=39 // pred_check_branch
          %211 = sbr.rel (%p209) target = $region44
        $region43: #{tpu_custom_call.1} parent=39 // pred_region
          %s212 = sand.u32 %s91, 1
          %s213 = scalar_lea.sflag [#allocation4], %s212
          %s214 = sand.u32 %s91, 1
          %s215 = smul.addr %s214, 2
          %s216 = scalar_lea.vmem [#allocation5], %s215
          %217 = dma.done %s213, 32
        $region44: #{tpu_custom_call.1} parent=39 // pred_fallthru
          _
      $region40: #{tpu_custom_call.1} parent=5 // pred_fallthru
        _
    $region6: #{tpu_custom_call.1} parent=1 // loop_footer
      %s18 = sadd.s32 1, %s14
    $region7: #{tpu_custom_call.1} parent=1 // loop_footer_branch
      %13 = sbr.rel target = $region3
    $region8: #{tpu_custom_call.1} parent=1 // loop_exit
      _
    %218 = vsyncpa [#allocation3], 1
    %s219 = scalar_lea.sflag [#allocation3], 1
    %220 = vsyncpa %s219, 1
    %221 = vsyncpa [#allocation4], 1
    %s222 = scalar_lea.sflag [#allocation4], 1
    %223 = vsyncpa %s222, 1

</llo_original>
